<compile_context>
chip_gen: v6e
topology: v6e:2x2x1
jax: 0.10.0
libtpu: 0.0.40
codegen_flags: <defaults>
</compile_context>

<pallas_src>
import functools

import jax
import jax.numpy as jnp
from jax.experimental import pallas as pl
from jax.experimental.pallas import tpu as pltpu

LANE = 128     # lane width: feature padding granularity
ROW = 128      # row padding granularity (minimum row tile)


def _round_up(v, m):
    return ((v + m - 1) // m) * m


def _pick_tiles(n_pad):
    # n_pad is always a multiple of 128. Prefer 256-deep tiles (v6e/v7x MXU depth)
    # once the grid still keeps >=2 steps per axis; 128 is always legal (v5e-friendly).
    t = 256 if (n_pad % 256 == 0 and n_pad >= 512) else 128
    return t, t


def sage_layer_kernel(a_ref, xall_ref, xself_ref, dinv_ref, w_ref, b_ref,
                      o_ref, acc_ref, *, apply_relu, cp):
    """One (row tile, neighbour tile) step of a SAGEConv layer.

    Grid axis 0 (parallel)  : tiles of target nodes (output rows).
    Grid axis 1 (arbitrary) : tiles of the neighbour/reduction dimension.
    """
    k = pl.program_id(1)

    @pl.when(k == 0)
    def _():
        acc_ref[...] = jnp.zeros_like(acc_ref)

    # Neighbour-sum partial product: int8 adjacency tile upcast to bf16 right
    # before the MXU; accumulation stays f32 in VMEM scratch.
    a = a_ref[...].astype(jnp.bfloat16)
    acc_ref[...] += jnp.dot(a, xall_ref[...], preferred_element_type=jnp.float32)

    @pl.when(k == pl.num_programs(1) - 1)
    def _():
        # Mean normalization in f32 (per-row 1/deg), then fused projection:
        #   out = agg @ Wl^T + x_self @ Wr^T + b
        # as two dots against static slices of the pre-stacked weight (no concat).
        agg = (acc_ref[...] * dinv_ref[...]).astype(jnp.bfloat16)
        h = jnp.dot(agg, w_ref[:cp, :], preferred_element_type=jnp.float32)
        h = h + jnp.dot(xself_ref[...], w_ref[cp:, :],
                        preferred_element_type=jnp.float32)
        h = h + b_ref[...]
        if apply_relu:
            h = jnp.maximum(h, 0.0)        # elementwise stays in f32 (v5e-safe)
        o_ref[...] = h.astype(o_ref.dtype)  # single lane-dense store


def _sage_layer(adj_i8, x_all, x_self, deg_inv, w_stack, bias, *,
                apply_relu, out_dtype):
    n_pad, cp = x_all.shape
    tm, tk = _pick_tiles(n_pad)
    kernel = functools.partial(sage_layer_kernel, apply_relu=apply_relu, cp=cp)
    return pl.pallas_call(
        kernel,
        out_shape=jax.ShapeDtypeStruct((n_pad, cp), out_dtype),
        grid=(n_pad // tm, n_pad // tk),
        in_specs=[
            pl.BlockSpec((tm, tk), lambda i, k: (i, k)),       # A tile (int8 counts)
            pl.BlockSpec((tk, cp), lambda i, k: (k, 0)),       # neighbour features
            pl.BlockSpec((tm, cp), lambda i, k: (i, 0)),       # self rows (root term)
            pl.BlockSpec((tm, 1), lambda i, k: (i, 0)),        # 1/deg (f32)
            pl.BlockSpec((2 * cp, cp), lambda i, k: (0, 0)),   # stacked [Wl^T ; Wr^T]
            pl.BlockSpec((1, cp), lambda i, k: (0, 0)),        # bias (f32)
        ],
        out_specs=pl.BlockSpec((tm, cp), lambda i, k: (i, 0)),
        scratch_shapes=[pltpu.VMEM((tm, cp), jnp.float32)],    # agg accumulator
        compiler_params=pltpu.CompilerParams(
            dimension_semantics=("parallel", "arbitrary")),
    )(adj_i8, x_all, x_self, deg_inv, w_stack, bias)


def prepare_params(params, hidden_channels):
    """One-time weight prep: transpose, stack (Wl|Wr), pad to lane width, bf16."""
    c = hidden_channels
    cp = _round_up(c, LANE)

    def pad_t(w):    # torch layout [C_out, C_in] -> transposed + zero-padded [cp, cp]
        return jnp.zeros((cp, cp), jnp.float32).at[:c, :c].set(w.T)

    def pad_b(b):
        return jnp.zeros((1, cp), jnp.float32).at[0, :c].set(b)

    w1 = jnp.concatenate([pad_t(params["wl1"]), pad_t(params["wr1"])], axis=0)
    w2 = jnp.concatenate([pad_t(params["wl2"]), pad_t(params["wr2"])], axis=0)
    return {
        "w1": w1.astype(jnp.bfloat16), "b1": pad_b(params["bl1"]),
        "w2": w2.astype(jnp.bfloat16), "b2": pad_b(params["bl2"]),
        "cp": cp,
    }


def prepare_graph(edge_index, num_nodes):
    """One-time dense graph prep (hoisted: reuse across forward calls).

    Returns the UNNORMALIZED adjacency (edge counts) as int8 plus per-row 1/deg
    in f32 so mean normalization happens at full precision inside the kernel.
    """
    n_pad = _round_up(num_nodes, ROW)
    src, dst = edge_index[0], edge_index[1]
    # TODO(synk): for large sparse graphs replace the dense N x N adjacency with
    #             CSR offsets in SMEM (PrefetchScalarGridSpec) + manual
    #             make_async_copy row gathers (O(E*C) traffic instead of O(N^2)).
    counts = jnp.zeros((n_pad, n_pad), jnp.float32).at[dst, src].add(1.0)
    deg = counts.sum(axis=1, keepdims=True)
    deg_inv = 1.0 / jnp.maximum(deg, 1.0)   # zero-in-degree rows stay 0 after scaling
    # int8 is exact for edge multiplicities up to 127 (plenty for typical graphs).
    return {"adj": counts.astype(jnp.int8), "deg_inv": deg_inv, "n_pad": n_pad}


def gnn_forward(x, graph, prep):
    """x: [N, C] float32; graph from prepare_graph; prep from prepare_params."""
    n, c = x.shape
    cp = prep["cp"]
    n_pad = graph["n_pad"]
    adj, deg_inv = graph["adj"], graph["deg_inv"]

    # Lane-dense, row-padded features (zero rows aggregate to zero -> harmless).
    x_pad = jnp.zeros((n_pad, cp), jnp.bfloat16).at[:n, :c].set(
        x.astype(jnp.bfloat16))

    # TODO(synk): for graphs whose padded features fit VMEM, fuse both layers into
    #             one pallas_call (h1 held in VMEM scratch) to skip the HBM round-trip.
    h1 = _sage_layer(adj, x_pad, x_pad, deg_inv, prep["w1"], prep["b1"],
                     apply_relu=True, out_dtype=jnp.bfloat16)
    out = _sage_layer(adj, h1, h1, deg_inv, prep["w2"], prep["b2"],
                      apply_relu=False, out_dtype=jnp.float32)
    return out[:n, :c]


def init_params(key, hidden_channels):
    ks = jax.random.split(key, 6)
    bound = 1.0 / jnp.sqrt(hidden_channels)
    u = lambda k, shape: jax.random.uniform(k, shape, jnp.float32, -bound, bound)
    return {
        "wl1": u(ks[0], (hidden_channels, hidden_channels)),  # lin_l layer 1 (bias)
        "bl1": u(ks[1], (hidden_channels,)),
        "wr1": u(ks[2], (hidden_channels, hidden_channels)),  # lin_r layer 1 (no bias)
        "wl2": u(ks[3], (hidden_channels, hidden_channels)),  # lin_l layer 2 (bias)
        "bl2": u(ks[4], (hidden_channels,)),
        "wr2": u(ks[5], (hidden_channels, hidden_channels)),  # lin_r layer 2 (no bias)
    }


def reference_forward(x, edge_index, params):
    """Pure-JAX f32 reference of the two SAGEConv layers (sanity check)."""
    n = x.shape[0]
    src, dst = edge_index[0], edge_index[1]

    def sage(h, wl, bl, wr):
        agg = jnp.zeros_like(h).at[dst].add(h[src])
        cnt = jnp.zeros((n, 1), jnp.float32).at[dst].add(1.0)
        agg = agg / jnp.maximum(cnt, 1.0)
        return agg @ wl.T + bl + h @ wr.T

    h1 = jax.nn.relu(sage(x, params["wl1"], params["bl1"], params["wr1"]))
    return sage(h1, params["wl2"], params["bl2"], params["wr2"])


if __name__ == "__main__":
    hidden_channels = 32
    num_nodes = 300          # pads to 384 rows -> 3x3 grid of (128,128) tiles
    num_edges = 1200

    key = jax.random.PRNGKey(0)
    k_x, k_src, k_dst, k_p = jax.random.split(key, 4)

    x = jax.random.normal(k_x, (num_nodes, hidden_channels), jnp.float32)
    src = jax.random.randint(k_src, (num_edges,), 0, num_nodes, jnp.int32)
    dst = jax.random.randint(k_dst, (num_edges,), 0, num_nodes, jnp.int32)
    edge_index = jnp.stack([src, dst], axis=0)

    params = init_params(k_p, hidden_channels)
    prep = prepare_params(params, hidden_channels)    # hoisted, done once
    graph = prepare_graph(edge_index, num_nodes)      # hoisted, done once

    out = gnn_forward(x, graph, prep)
    out = jax.block_until_ready(out)

    ref = reference_forward(x, edge_index, params)
    # Tolerance loosened because features/weights feed the MXU in bf16;
    # aggregation accumulates in f32 and mean-normalization is exact f32.
    assert jnp.allclose(out, ref, atol=5e-2, rtol=5e-2), "mismatch vs JAX reference"

    print("KERNEL_OK")
</pallas_src>

<mosaic_0001>
module attributes {stable_mosaic.version = 11 : i64} {
  func.func @sage_layer_kernel(%arg0: i32, %arg1: i32, %arg2: memref<128x128xi8, #tpu.memory_space<vmem>>, %arg3: memref<128x128xbf16, #tpu.memory_space<vmem>>, %arg4: memref<128x128xbf16, #tpu.memory_space<vmem>>, %arg5: memref<128x1xf32, #tpu.memory_space<vmem>>, %arg6: memref<256x128xbf16, #tpu.memory_space<vmem>>, %arg7: memref<1x128xf32, #tpu.memory_space<vmem>>, %arg8: memref<128x128xbf16, #tpu.memory_space<vmem>>, %arg9: memref<128x128xf32, #tpu.memory_space<vmem>>) attributes {dimension_semantics = [#tpu.dimension_semantics<parallel>, #tpu.dimension_semantics<arbitrary>], iteration_bounds = array<i64: 3, 3>, scalar_prefetch = 0 : i64, scratch_operands = 1 : i64, tpu.core_type = #tpu.core_type<tc>, window_params = [{transform_indices = @transform_0, window_bounds = array<i64: 128, 128>}, {transform_indices = @transform_1, window_bounds = array<i64: 128, 128>}, {transform_indices = @transform_2, window_bounds = array<i64: 128, 128>}, {transform_indices = @transform_3, window_bounds = array<i64: 128, 1>}, {pipeline_mode = #tpu.pipeline_mode<synchronous>, transform_indices = @transform_4, window_bounds = array<i64: 256, 128>}, {pipeline_mode = #tpu.pipeline_mode<synchronous>, transform_indices = @transform_5, window_bounds = array<i64: 1, 128>}, {transform_indices = @transform_6, window_bounds = array<i64: 128, 128>}]} {
    %c0_i32 = arith.constant 0 : i32
    %0 = arith.cmpi eq, %arg1, %c0_i32 : i32
    %1 = arith.extui %0 : i1 to i32
    %c0_i32_0 = arith.constant 0 : i32
    %2 = arith.cmpi ne, %1, %c0_i32_0 : i32
    scf.if %2 {
      %cst_9 = arith.constant 0.000000e+00 : f32
      %13 = vector.broadcast %cst_9 : f32 to vector<128x128xf32>
      %c0_10 = arith.constant 0 : index
      %c0_11 = arith.constant 0 : index
      %14 = vector.load %arg9[%c0_10, %c0_11] : memref<128x128xf32, #tpu.memory_space<vmem>>, vector<128x128xf32>
      tpu.vector_store %arg9[%c0_10, %c0_11], %13 {strides = array<i32>} : memref<128x128xf32, #tpu.memory_space<vmem>>, vector<128x128xf32>,
    } else {
    }
    %c0 = arith.constant 0 : index
    %c0_1 = arith.constant 0 : index
    %3 = vector.load %arg2[%c0, %c0_1] : memref<128x128xi8, #tpu.memory_space<vmem>>, vector<128x128xi8>
    %4 = arith.sitofp %3 : vector<128x128xi8> to vector<128x128xbf16>
    %c0_2 = arith.constant 0 : index
    %c0_3 = arith.constant 0 : index
    %5 = vector.load %arg9[%c0_2, %c0_3] : memref<128x128xf32, #tpu.memory_space<vmem>>, vector<128x128xf32>
    %c0_4 = arith.constant 0 : index
    %c0_5 = arith.constant 0 : index
    %6 = vector.load %arg3[%c0_4, %c0_5] : memref<128x128xbf16, #tpu.memory_space<vmem>>, vector<128x128xbf16>
    %cst = arith.constant dense<0.000000e+00> : vector<128x128xf32>
    %7 = tpu.matmul %4, %6, %cst {dimension_numbers = #tpu.dot_dimension_numbers<[1], [0], [0], [1], [0, 0, 1, 1], [], []>} : vector<128x128xbf16>, vector<128x128xbf16>, vector<128x128xf32> -> vector<128x128xf32>
    %8 = arith.addf %5, %7 : vector<128x128xf32>
    %c0_6 = arith.constant 0 : index
    %c0_7 = arith.constant 0 : index
    %9 = vector.load %arg9[%c0_6, %c0_7] : memref<128x128xf32, #tpu.memory_space<vmem>>, vector<128x128xf32>
    tpu.vector_store %arg9[%c0_6, %c0_7], %8 {strides = array<i32>} : memref<128x128xf32, #tpu.memory_space<vmem>>, vector<128x128xf32>,
    %c2_i32 = arith.constant 2 : i32
    %10 = arith.cmpi eq, %arg1, %c2_i32 : i32
    %11 = arith.extui %10 : i1 to i32
    %c0_i32_8 = arith.constant 0 : i32
    %12 = arith.cmpi ne, %11, %c0_i32_8 : i32
    scf.if %12 {
      %c0_9 = arith.constant 0 : index
      %c0_10 = arith.constant 0 : index
      %13 = vector.load %arg9[%c0_9, %c0_10] : memref<128x128xf32, #tpu.memory_space<vmem>>, vector<128x128xf32>
      %c0_11 = arith.constant 0 : index
      %c0_12 = arith.constant 0 : index
      %14 = vector.load %arg5[%c0_11, %c0_12] : memref<128x1xf32, #tpu.memory_space<vmem>>, vector<128x1xf32>
      %15 = vector.broadcast %14 : vector<128x1xf32> to vector<128x128xf32>
      %16 = arith.mulf %13, %15 : vector<128x128xf32>
      %17 = arith.truncf %16 : vector<128x128xf32> to vector<128x128xbf16>
      %c0_13 = arith.constant 0 : index
      %c0_14 = arith.constant 0 : index
      %18 = vector.load %arg6[%c0_13, %c0_14] : memref<256x128xbf16, #tpu.memory_space<vmem>>, vector<128x128xbf16>
      %cst_15 = arith.constant dense<0.000000e+00> : vector<128x128xf32>
      %19 = tpu.matmul %17, %18, %cst_15 {dimension_numbers = #tpu.dot_dimension_numbers<[1], [0], [0], [1], [0, 0, 1, 1], [], []>} : vector<128x128xbf16>, vector<128x128xbf16>, vector<128x128xf32> -> vector<128x128xf32>
      %c0_16 = arith.constant 0 : index
      %c0_17 = arith.constant 0 : index
      %20 = vector.load %arg4[%c0_16, %c0_17] : memref<128x128xbf16, #tpu.memory_space<vmem>>, vector<128x128xbf16>
      %c128 = arith.constant 128 : index
      %c0_18 = arith.constant 0 : index
      %21 = vector.load %arg6[%c128, %c0_18] : memref<256x128xbf16, #tpu.memory_space<vmem>>, vector<128x128xbf16>
      %cst_19 = arith.constant dense<0.000000e+00> : vector<128x128xf32>
      %22 = tpu.matmul %20, %21, %cst_19 {dimension_numbers = #tpu.dot_dimension_numbers<[1], [0], [0], [1], [0, 0, 1, 1], [], []>} : vector<128x128xbf16>, vector<128x128xbf16>, vector<128x128xf32> -> vector<128x128xf32>
      %23 = arith.addf %19, %22 : vector<128x128xf32>
      %c0_20 = arith.constant 0 : index
      %c0_21 = arith.constant 0 : index
      %24 = vector.load %arg7[%c0_20, %c0_21] : memref<1x128xf32, #tpu.memory_space<vmem>>, vector<1x128xf32>
      %25 = vector.broadcast %24 : vector<1x128xf32> to vector<128x128xf32>
      %26 = arith.addf %23, %25 : vector<128x128xf32>
      %cst_22 = arith.constant 0.000000e+00 : f32
      %27 = vector.broadcast %cst_22 : f32 to vector<128x128xf32>
      %28 = arith.maximumf %26, %27 : vector<128x128xf32>
      %29 = arith.truncf %28 : vector<128x128xf32> to vector<128x128xbf16>
      %c0_23 = arith.constant 0 : index
      %c0_24 = arith.constant 0 : index
      %30 = vector.load %arg8[%c0_23, %c0_24] : memref<128x128xbf16, #tpu.memory_space<vmem>>, vector<128x128xbf16>
      tpu.vector_store %arg8[%c0_23, %c0_24], %29 {strides = array<i32>} : memref<128x128xbf16, #tpu.memory_space<vmem>>, vector<128x128xbf16>,
    } else {
    }
    return
  }
  func.func @transform_0(%arg0: i32, %arg1: i32) -> (i32, i32) {
    %c0_i32 = arith.constant 0 : i32
    return %arg0, %arg1 : i32, i32
  }
  func.func @transform_1(%arg0: i32, %arg1: i32) -> (i32, i32) {
    %c0_i32 = arith.constant 0 : i32
    %c0_i32_0 = arith.constant 0 : i32
    return %arg1, %c0_i32 : i32, i32
  }
  func.func @transform_2(%arg0: i32, %arg1: i32) -> (i32, i32) {
    %c0_i32 = arith.constant 0 : i32
    %c0_i32_0 = arith.constant 0 : i32
    return %arg0, %c0_i32 : i32, i32
  }
  func.func @transform_3(%arg0: i32, %arg1: i32) -> (i32, i32) {
    %c0_i32 = arith.constant 0 : i32
    %c0_i32_0 = arith.constant 0 : i32
    return %arg0, %c0_i32 : i32, i32
  }
  func.func @transform_4(%arg0: i32, %arg1: i32) -> (i32, i32) {
    %c0_i32 = arith.constant 0 : i32
    %c0_i32_0 = arith.constant 0 : i32
    %c0_i32_1 = arith.constant 0 : i32
    return %c0_i32, %c0_i32_0 : i32, i32
  }
  func.func @transform_5(%arg0: i32, %arg1: i32) -> (i32, i32) {
    %c0_i32 = arith.constant 0 : i32
    %c0_i32_0 = arith.constant 0 : i32
    %c0_i32_1 = arith.constant 0 : i32
    return %c0_i32, %c0_i32_0 : i32, i32
  }
  func.func @transform_6(%arg0: i32, %arg1: i32) -> (i32, i32) {
    %c0_i32 = arith.constant 0 : i32
    %c0_i32_0 = arith.constant 0 : i32
    return %arg0, %c0_i32 : i32, i32
  }
}

</mosaic_0001>

<llo_original>
// kernel: tpu_custom_call.1
$region0: #{tpu_custom_call.1}
  #allocation0 [shape = 'u32[]', space=smem, size = 0x4, offset = 0x4, fixed_abs, tag = 'smem constant byte address 0x4 - core index']
  #allocation1 [shape = 'u32[144,128]{1,0:T(1,128)}', space=vmem, size = 0x12000, scoped, tag = 'internal scratch']
  #allocation2 [shape = 'f32[128,128]{1,0:T(8,128)}', space=vmem, size = 0x10000, scoped, tag = 'scratch operand']
  %s0 = inlined_call_operand.vmem [shape: s8[384,384], index: 0, kind: input, shape index: {}]
  %s1 = inlined_call_operand.hbm [shape: bf16[384,128], index: 1, kind: input, shape index: {}]
  %s2 = inlined_call_operand.hbm [shape: bf16[384,128], index: 2, kind: input, shape index: {}]
  %s3 = inlined_call_operand.vmem [shape: f32[384,1], index: 3, kind: input, shape index: {}]
  %s4 = inlined_call_operand.hbm [shape: bf16[256,128], index: 4, kind: input, shape index: {}]
  %s5 = inlined_call_operand.vmem [shape: f32[1,128], index: 5, kind: input, shape index: {}]
  %s6 = inlined_call_operand.hbm [shape: bf16[384,128], index: 6, kind: output, shape index: {}]
  %s7 = sld [smem:[#allocation0]]
  $region115: #{tpu_custom_call.1} parent=0
    _
  %s9 = ssub.s32 1, %s7
  %s10 = scalar_select 0, %s9, %s7
  $region1: #{tpu_custom_call.1} parent=0
    #allocation3 [shape = 'u8[32768]{0}', space=vmem, size = 0x8000, scoped, tag = 'input window, operand 0']
    #allocation4 [shape = 'u8[65536]{0}', space=vmem, size = 0x10000, scoped, tag = 'input window, operand 1']
    #allocation5 [shape = 's32[2]{0}', space=sflag, size = 0x8, scoped, tag = 'scoped memory for tpu_custom_call.1']
    #allocation6 [shape = 's32[2]{0}', space=sflag, size = 0x8, scoped, tag = 'scoped memory for tpu_custom_call.1']
    #allocation7 [shape = 'u8[65536]{0}', space=vmem, size = 0x10000, scoped, tag = 'input window, operand 2']
    #allocation8 [shape = 's32[2]{0}', space=sflag, size = 0x8, scoped, tag = 'scoped memory for tpu_custom_call.1']
    #allocation9 [shape = 'u8[65536]{0}', space=vmem, size = 0x10000, scoped, tag = 'input window, operand 4, single buffered']
    #allocation10 [shape = 'u8[65536]{0}', space=vmem, size = 0x10000, scoped, tag = 'output window, operand 0']
    %11 = vsyncpa [#allocation5], 0
    %s12 = scalar_lea.sflag [#allocation5], 1
    %13 = vsyncpa %s12, 0
    %14 = vsyncpa [#allocation8], 0
    %s15 = scalar_lea.sflag [#allocation8], 1
    %16 = vsyncpa %s15, 0
    %17 = vsyncpa [#allocation6], 0
    %s18 = scalar_lea.sflag [#allocation6], 1
    %19 = vsyncpa %s18, 0
    loop: start=0, step=1, limit=11
    $region2: #{tpu_custom_call.1} parent=1 // loop_pre_header
      _
    $region3: #{tpu_custom_call.1} parent=1 // loop_header
      %s21 = sphi 0, %s25
      %p22 = scmp.ge.s32.totalorder %s21, 11
      %s28 = sphi 0, %s40
      %s29 = sphi 0, %s36
      %s30 = sphi 0, %s28
      %s31 = sphi 0, %s29
      %s32 = sphi 0, %s30
      %s33 = sphi 0, %s31
      %s45 = sphi 0, %s47
      %s48 = sphi 0, %s45
      %s49 = sphi 0, %s48
      %s65 = sphi 0, %s49
      %s71 = sphi 0, %s73
      %s74 = sphi 0, %s71
      %s75 = sphi 0, %s74
      %s91 = sphi 0, %s75
      %s97 = sphi 0, %s99
      %s100 = sphi 0, %s97
      %s101 = sphi 0, %s100
      %s117 = sphi 0, %s101
      %s123 = sphi 0, %s125
      %s126 = sphi 0, %s123
      %s127 = sphi 0, %s126
      %s143 = sphi 0, %s127
      %s147 = sphi 0, %s147
      %s149 = sphi 0, %s147
      %s150 = sphi 0, %s149
      %s164 = sphi 0, %s150
      %s168 = sphi 0, %s168
      %s170 = sphi 0, %s168
      %s171 = sphi 0, %s170
      %s185 = sphi 0, %s171
      %s191 = sphi 0, %s193
      %s194 = sphi 0, %s191
      %s195 = sphi 0, %s194
      %s211 = sphi 0, %s195
    $region4: #{tpu_custom_call.1} parent=1 // loop_header_branch
      %24 = sbr.rel (%p22) target = $region8
    $region5: #{tpu_custom_call.1} parent=1 // loop_body
      %s26 = ssub.s32 %s21, 1
      %s27 = ssub.s32 %s21, 2
      %s34 = sadd.s32 1, %s29
      %p35 = scmp.ge.s32.totalorder %s34, 3
      %s36 = scalar_select %p35, 0, %s34
      %s37 = sadd.s32 1, %s28
      %s38 = scalar_select %p35, %s37, %s28
      %p39 = scmp.ge.s32.totalorder %s38, 3
      %s40 = scalar_select %p39, 0, %s38
      %s41 = ssub.s32 %s28, %s40
      %s42 = ssub.s32 %s29, %s36
      %s43 = sor.u32 %s41, %s42
      %p44 = scmp.eq.s32.totalorder %s43, 0
      %s46 = sadd.s32 %s45, 1
      %s47 = scalar_select %p44, %s45, %s46
      %p50 = pneg %p44
      %p51 = scmp.eq.s32.totalorder %s21, 8
      %p52 = por %p50, %p51
      %p53 = scmp.ne.s32.totalorder %s45, %s48
      %p54 = scmp.eq.s32.totalorder %s21, 0
      %p55 = por %p53, %p54
      %p56 = scmp.ne.s32.totalorder %s45, %s48
      %p57 = scmp.eq.s32.totalorder %s26, 8
      %p58 = por %p56, %p57
      %p59 = scmp.ne.s32.totalorder %s48, %s49
      %p60 = scmp.eq.s32.totalorder %s26, 0
      %p61 = por %p59, %p60
      %p62 = scmp.ne.s32.totalorder %s48, %s49
      %p63 = scmp.eq.s32.totalorder %s27, 8
      %p64 = por %p62, %p63
      %p66 = scmp.ne.s32.totalorder %s49, %s65
      %p67 = scmp.eq.s32.totalorder %s27, 0
      %p68 = por %p66, %p67
      %s69 = ssub.s32 %s29, %s36
      %p70 = scmp.eq.s32.totalorder %s69, 0
      %s72 = sadd.s32 %s71, 1
      %s73 = scalar_select %p70, %s71, %s72
      %p76 = pneg %p70
      %p77 = scmp.eq.s32.totalorder %s21, 8
      %p78 = por %p76, %p77
      %p79 = scmp.ne.s32.totalorder %s71, %s74
      %p80 = scmp.eq.s32.totalorder %s21, 0
      %p81 = por %p79, %p80
      %p82 = scmp.ne.s32.totalorder %s71, %s74
      %p83 = scmp.eq.s32.totalorder %s26, 8
      %p84 = por %p82, %p83
      %p85 = scmp.ne.s32.totalorder %s74, %s75
      %p86 = scmp.eq.s32.totalorder %s26, 0
      %p87 = por %p85, %p86
      %p88 = scmp.ne.s32.totalorder %s74, %s75
      %p89 = scmp.eq.s32.totalorder %s27, 8
      %p90 = por %p88, %p89
      %p92 = scmp.ne.s32.totalorder %s75, %s91
      %p93 = scmp.eq.s32.totalorder %s27, 0
      %p94 = por %p92, %p93
      %s95 = ssub.s32 %s28, %s40
      %p96 = scmp.eq.s32.totalorder %s95, 0
      %s98 = sadd.s32 %s97, 1
      %s99 = scalar_select %p96, %s97, %s98
      %p102 = pneg %p96
      %p103 = scmp.eq.s32.totalorder %s21, 8
      %p104 = por %p102, %p103
      %p105 = scmp.ne.s32.totalorder %s97, %s100
      %p106 = scmp.eq.s32.totalorder %s21, 0
      %p107 = por %p105, %p106
      %p108 = scmp.ne.s32.totalorder %s97, %s100
      %p109 = scmp.eq.s32.totalorder %s26, 8
      %p110 = por %p108, %p109
      %p111 = scmp.ne.s32.totalorder %s100, %s101
      %p112 = scmp.eq.s32.totalorder %s26, 0
      %p113 = por %p111, %p112
      %p114 = scmp.ne.s32.totalorder %s100, %s101
      %p115 = scmp.eq.s32.totalorder %s27, 8
      %p116 = por %p114, %p115
      %p118 = scmp.ne.s32.totalorder %s101, %s117
      %p119 = scmp.eq.s32.totalorder %s27, 0
      %p120 = por %p118, %p119
      %s121 = ssub.s32 %s28, %s40
      %p122 = scmp.eq.s32.totalorder %s121, 0
      %s124 = sadd.s32 %s123, 1
      %s125 = scalar_select %p122, %s123, %s124
      %p128 = pneg %p122
      %p129 = scmp.eq.s32.totalorder %s21, 8
      %p130 = por %p128, %p129
      %p131 = scmp.ne.s32.totalorder %s123, %s126
      %p132 = scmp.eq.s32.totalorder %s21, 0
      %p133 = por %p131, %p132
      %p134 = scmp.ne.s32.totalorder %s123, %s126
      %p135 = scmp.eq.s32.totalorder %s26, 8
      %p136 = por %p134, %p135
      %p137 = scmp.ne.s32.totalorder %s126, %s127
      %p138 = scmp.eq.s32.totalorder %s26, 0
      %p139 = por %p137, %p138
      %p140 = scmp.ne.s32.totalorder %s126, %s127
      %p141 = scmp.eq.s32.totalorder %s27, 8
      %p142 = por %p140, %p141
      %p144 = scmp.ne.s32.totalorder %s127, %s143
      %p145 = scmp.eq.s32.totalorder %s27, 0
      %p146 = por %p144, %p145
      %s148 = sadd.s32 %s147, 1
      %p151 = scmp.eq.s32.totalorder %s21, 8
      %p152 = scmp.ne.s32.totalorder %s147, %s149
      %p153 = scmp.eq.s32.totalorder %s21, 0
      %p154 = por %p152, %p153
      %p155 = scmp.ne.s32.totalorder %s147, %s149
      %p156 = scmp.eq.s32.totalorder %s26, 8
      %p157 = por %p155, %p156
      %p158 = scmp.ne.s32.totalorder %s149, %s150
      %p159 = scmp.eq.s32.totalorder %s26, 0
      %p160 = por %p158, %p159
      %p161 = scmp.ne.s32.totalorder %s149, %s150
      %p162 = scmp.eq.s32.totalorder %s27, 8
      %p163 = por %p161, %p162
      %p165 = scmp.ne.s32.totalorder %s150, %s164
      %p166 = scmp.eq.s32.totalorder %s27, 0
      %p167 = por %p165, %p166
      %s169 = sadd.s32 %s168, 1
      %p172 = scmp.eq.s32.totalorder %s21, 8
      %p173 = scmp.ne.s32.totalorder %s168, %s170
      %p174 = scmp.eq.s32.totalorder %s21, 0
      %p175 = por %p173, %p174
      %p176 = scmp.ne.s32.totalorder %s168, %s170
      %p177 = scmp.eq.s32.totalorder %s26, 8
      %p178 = por %p176, %p177
      %p179 = scmp.ne.s32.totalorder %s170, %s171
      %p180 = scmp.eq.s32.totalorder %s26, 0
      %p181 = por %p179, %p180
      %p182 = scmp.ne.s32.totalorder %s170, %s171
      %p183 = scmp.eq.s32.totalorder %s27, 8
      %p184 = por %p182, %p183
      %p186 = scmp.ne.s32.totalorder %s171, %s185
      %p187 = scmp.eq.s32.totalorder %s27, 0
      %p188 = por %p186, %p187
      %s189 = ssub.s32 %s28, %s40
      %p190 = scmp.eq.s32.totalorder %s189, 0
      %s192 = sadd.s32 %s191, 1
      %s193 = scalar_select %p190, %s191, %s192
      %p196 = pneg %p190
      %p197 = scmp.eq.s32.totalorder %s21, 8
      %p198 = por %p196, %p197
      %p199 = scmp.ne.s32.totalorder %s191, %s194
      %p200 = scmp.eq.s32.totalorder %s21, 0
      %p201 = por %p199, %p200
      %p202 = scmp.ne.s32.totalorder %s191, %s194
      %p203 = scmp.eq.s32.totalorder %s26, 8
      %p204 = por %p202, %p203
      %p205 = scmp.ne.s32.totalorder %s194, %s195
      %p206 = scmp.eq.s32.totalorder %s26, 0
      %p207 = por %p205, %p206
      %p208 = scmp.ne.s32.totalorder %s194, %s195
      %p209 = scmp.eq.s32.totalorder %s27, 8
      %p210 = por %p208, %p209
      %p212 = scmp.ne.s32.totalorder %s195, %s211
      %p213 = scmp.eq.s32.totalorder %s27, 0
      %p214 = por %p212, %p213
      %p215 = scmp.le.s32.totalorder 1, %s21
      %p216 = scmp.lt.s32.totalorder %s21, 10
      %p217 = pnand %p215, %p216
      %p218 = pneg %p217
      // Predicated region
      $region9: #{tpu_custom_call.1} parent=5 // pred_check
        _
      $region10: #{tpu_custom_call.1} parent=5 // pred_check_branch
        %220 = sbr.rel (%p217) target = $region12
      $region11: #{tpu_custom_call.1} parent=5 // pred_region
        %s221 = ssub.s32 %s21, 1
        // Predicated region
        $region13: #{tpu_custom_call.1} parent=11 // pred_check
          %p222 = pneg %p160
        $region14: #{tpu_custom_call.1} parent=11 // pred_check_branch
          %224 = sbr.rel (%p222) target = $region16
        $region15: #{tpu_custom_call.1} parent=11 // pred_region
          %s226 = ssub.s32 2048, 2048
          %227 = vsyncadd [#allocation8], %s226
          %s228 = sshll.u32 [#allocation9], 4
          %s229 = int_to_ptr.vmem [resolvable:$true] %s228
          %234 = dma.hbm_to_vmem [thread:$0]  %s4, 2048, %s229, [#allocation8], 64, 64, 4
        $region16: #{tpu_custom_call.1} parent=11 // pred_fallthru
          _
        // Predicated region
        $region17: #{tpu_custom_call.1} parent=11 // pred_check
          %p235 = pneg %p181
        $region18: #{tpu_custom_call.1} parent=11 // pred_check_branch
          %237 = sbr.rel (%p235) target = $region20
        $region19: #{tpu_custom_call.1} parent=11 // pred_region
          _
        $region20: #{tpu_custom_call.1} parent=11 // pred_fallthru
          _
      $region12: #{tpu_custom_call.1} parent=5 // pred_fallthru
        _
      %p238 = scmp.lt.s32.totalorder %s21, 9
      // Predicated region
      $region21: #{tpu_custom_call.1} parent=5 // pred_check
        %p239 = pneg %p238
      $region22: #{tpu_custom_call.1} parent=5 // pred_check_branch
        %241 = sbr.rel (%p239) target = $region24
      $region23: #{tpu_custom_call.1} parent=5 // pred_region
        // Predicated region
        $region25: #{tpu_custom_call.1} parent=23 // pred_check
          %p242 = pneg %p55
        $region26: #{tpu_custom_call.1} parent=23 // pred_check_branch
          %244 = sbr.rel (%p242) target = $region28
        $region27: #{tpu_custom_call.1} parent=23 // pred_region
          %s245 = sand.u32 %s45, 1
          %s246 = sand.u32 %s45, 1
          %s247 = smul.addr %s246, 32
          %s248 = scalar_lea.vmem [#allocation3], %s247
          %s249 = smul.u32 4, %s28
          %s250 = smul.addr %s249, 3
          %s251 = sadd.s32 %s29, %s250
          %s252 = smul.addr %s251, 8
          %s253 = scalar_lea.vmem %s0, %s252
          // Predicated region
          $region29: #{tpu_custom_call.1} parent=27 // pred_check
            _
          $region30: #{tpu_custom_call.1} parent=27 // pred_check_branch
            %255 = sbr.rel (0) target = $region32
          $region31: #{tpu_custom_call.1} parent=27 // pred_region
            // Predicated region
            $region33: #{tpu_custom_call.1} parent=31 // pred_check
              _
            $region34: #{tpu_custom_call.1} parent=31 // pred_check_branch
              %257 = sbr.rel (0) target = $region36
            $region35: #{tpu_custom_call.1} parent=31 // pred_region
              // Predicated region
              $region48: #{tpu_custom_call.1} parent=35 // pred_check
                _
              $region49: #{tpu_custom_call.1} parent=35 // pred_check_branch
                %279 = sbr.rel (0) target = $region51
              $region50: #{tpu_custom_call.1} parent=35 // pred_region
                loop: start=0, step=1, limit=1
                $region52: #{tpu_custom_call.1} parent=50 // loop_pre_header
                  _
                $region53: #{tpu_custom_call.1} parent=50 // loop_header
                  %s281 = sphi 0, %s285
                  %p282 = scmp.ge.s32.totalorder %s281, 1
                  %s286 = sphi %s253, %s253
                  %s287 = sphi %s248, %s248
                $region54: #{tpu_custom_call.1} parent=50 // loop_header_branch
                  %284 = sbr.rel (%p282) target = $region58
                $region55: #{tpu_custom_call.1} parent=50 // loop_body
                  %v288 = vld [vmem:[%s286] sm:$0xff]
                  %289 = vst [vmem:[%s287] sm:$0xff] %v288
                  %v290 = vld [vmem:[%s286 + $0x18] sm:$0xff]
                  %291 = vst [vmem:[%s287 + $0x8] sm:$0xff] %v290
                  %v292 = vld [vmem:[%s286 + $0x30] sm:$0xff]
                  %293 = vst [vmem:[%s287 + $0x10] sm:$0xff] %v292
                  %v294 = vld [vmem:[%s286 + $0x48] sm:$0xff]
                  %295 = vst [vmem:[%s287 + $0x18] sm:$0xff] %v294
                $region56: #{tpu_custom_call.1} parent=50 // loop_footer
                  %s285 = sadd.s32 1, %s281
                $region57: #{tpu_custom_call.1} parent=50 // loop_footer_branch
                  %280 = sbr.rel target = $region53
                $region58: #{tpu_custom_call.1} parent=50 // loop_exit
                  _
              $region51: #{tpu_custom_call.1} parent=35 // pred_fallthru
                _
              // Predicated region
              $region59: #{tpu_custom_call.1} parent=35 // pred_check
                _
              $region60: #{tpu_custom_call.1} parent=35 // pred_check_branch
                %297 = sbr.rel target = $region62
              $region61: #{tpu_custom_call.1} parent=35 // pred_region
                _
              $region62: #{tpu_custom_call.1} parent=35 // pred_fallthru
                _
            $region36: #{tpu_custom_call.1} parent=31 // pred_fallthru
              _
            // Predicated region
            $region37: #{tpu_custom_call.1} parent=31 // pred_check
              _
            $region38: #{tpu_custom_call.1} parent=31 // pred_check_branch
              %259 = sbr.rel target = $region40
            $region39: #{tpu_custom_call.1} parent=31 // pred_region
              %s261 = ssub.s32 256, 1
              loop: start=0, step=1, limit=1
              $region41: #{tpu_custom_call.1} parent=39 // loop_pre_header
                _
              $region42: #{tpu_custom_call.1} parent=39 // loop_header
                %s263 = sphi 0, %s267
                %p264 = scmp.ge.s32.totalorder %s263, 1
                %s268 = sphi %s253, %s253
                %s269 = sphi %s248, %s248
              $region43: #{tpu_custom_call.1} parent=39 // loop_header_branch
                %266 = sbr.rel (%p264) target = $region47
              $region44: #{tpu_custom_call.1} parent=39 // loop_body
                %v270 = vld [vmem:[%s268] sm:%s261]
                %271 = vst [vmem:[%s269] sm:%s261] %v270
                %v272 = vld [vmem:[%s268 + $0x18] sm:%s261]
                %273 = vst [vmem:[%s269 + $0x8] sm:%s261] %v272
                %v274 = vld [vmem:[%s268 + $0x30] sm:%s261]
                %275 = vst [vmem:[%s269 + $0x10] sm:%s261] %v274
                %v276 = vld [vmem:[%s268 + $0x48] sm:%s261]
                %277 = vst [vmem:[%s269 + $0x18] sm:%s261] %v276
              $region45: #{tpu_custom_call.1} parent=39 // loop_footer
                %s267 = sadd.s32 1, %s263
              $region46: #{tpu_custom_call.1} parent=39 // loop_footer_branch
                %262 = sbr.rel target = $region42
              $region47: #{tpu_custom_call.1} parent=39 // loop_exit
                _
            $region40: #{tpu_custom_call.1} parent=31 // pred_fallthru
              _
          $region32: #{tpu_custom_call.1} parent=27 // pred_fallthru
            _
          %298 = vnop
        $region28: #{tpu_custom_call.1} parent=23 // pred_fallthru
          _
        // Predicated region
        $region63: #{tpu_custom_call.1} parent=23 // pred_check
          %p299 = pneg %p81
        $region64: #{tpu_custom_call.1} parent=23 // pred_check_branch
          %301 = sbr.rel (%p299) target = $region66
        $region65: #{tpu_custom_call.1} parent=23 // pred_region
          %s302 = sand.u32 %s71, 1
          %s303 = scalar_lea.sflag [#allocation5], %s302
          %s304 = sand.u32 %s71, 1
          %s305 = smul.addr %s304, 64
          %s306 = scalar_lea.vmem [#allocation4], %s305
          %s307 = smul.u32 16, %s29
          %s309 = ssub.s32 1024, 1024
          %310 = vsyncadd %s303, %s309
          %s311 = smul.addr %s307, 64
          %s312 = scalar_lea.hbm %s1, %s311
          %s313 = sshll.u32 %s306, 4
          %s314 = int_to_ptr.vmem [resolvable:$true] %s313
          %319 = dma.hbm_to_vmem [thread:$0]  %s312, 1024, %s314, %s303, 64, 64, 4
        $region66: #{tpu_custom_call.1} parent=23 // pred_fallthru
          _
        // Predicated region
        $region67: #{tpu_custom_call.1} parent=23 // pred_check
          %p320 = pneg %p107
        $region68: #{tpu_custom_call.1} parent=23 // pred_check_branch
          %322 = sbr.rel (%p320) target = $region70
        $region69: #{tpu_custom_call.1} parent=23 // pred_region
          %s323 = sand.u32 %s21, 1
          %s324 = scalar_lea.sflag [#allocation8], %s323
          %s325 = sand.u32 %s97, 1
          %s326 = smul.addr %s325, 64
          %s327 = scalar_lea.vmem [#allocation7], %s326
          %s328 = smul.u32 16, %s28
          %s330 = ssub.s32 1024, 1024
          %331 = vsyncadd %s324, %s330
          %s332 = smul.addr %s328, 64
          %s333 = scalar_lea.hbm %s2, %s332
          %s334 = sshll.u32 %s327, 4
          %s335 = int_to_ptr.vmem [resolvable:$true] %s334
          %340 = dma.hbm_to_vmem [thread:$0]  %s333, 1024, %s335, %s324, 64, 64, 4
        $region70: #{tpu_custom_call.1} parent=23 // pred_fallthru
          _
        // Predicated region
        $region71: #{tpu_custom_call.1} parent=23 // pred_check
          %p341 = pneg %p133
        $region72: #{tpu_custom_call.1} parent=23 // pred_check_branch
          %343 = sbr.rel (%p341) target = $region74
        $region73: #{tpu_custom_call.1} parent=23 // pred_region
          %s344 = smul.u32 16, %s28
          %p345 = scmp.lt.s32.totalorder %s344, 47
          %s346 = scalar_select %p345, %s344, 47
          %s347 = smul.addr %s346, 8
          %s348 = scalar_lea.vmem %s3, %s347
          %s349 = smul.u32 16, %s28
        $region74: #{tpu_custom_call.1} parent=23 // pred_fallthru
          _
      $region24: #{tpu_custom_call.1} parent=5 // pred_fallthru
        _
      %p350 = scmp.le.s32.totalorder 1, %s21
      %p351 = scmp.lt.s32.totalorder %s21, 10
      %p352 = pnand %p350, %p351
      %p353 = pneg %p352
      // Predicated region
      $region75: #{tpu_custom_call.1} parent=5 // pred_check
        _
      $region76: #{tpu_custom_call.1} parent=5 // pred_check_branch
        %355 = sbr.rel (%p352) target = $region78
      $region77: #{tpu_custom_call.1} parent=5 // pred_region
        %s356 = ssub.s32 %s21, 1
        %s357 = sand.u32 %s48, 1
        %s358 = sand.u32 %s48, 1
        %s359 = smul.addr %s358, 32
        %s360 = scalar_lea.vmem [#allocation3], %s359
        // Predicated region
        $region79: #{tpu_custom_call.1} parent=77 // pred_check
          %p361 = pneg %p61
        $region80: #{tpu_custom_call.1} parent=77 // pred_check_branch
          %363 = sbr.rel (%p361) target = $region82
        $region81: #{tpu_custom_call.1} parent=77 // pred_region
          _
        $region82: #{tpu_custom_call.1} parent=77 // pred_fallthru
          _
        %s364 = sand.u32 %s74, 1
        %s365 = scalar_lea.sflag [#allocation5], %s364
        %s366 = sand.u32 %s74, 1
        %s367 = smul.addr %s366, 64
        %s368 = scalar_lea.vmem [#allocation4], %s367
        // Predicated region
        $region83: #{tpu_custom_call.1} parent=77 // pred_check
          %p369 = pneg %p87
        $region84: #{tpu_custom_call.1} parent=77 // pred_check_branch
          %371 = sbr.rel (%p369) target = $region86
        $region85: #{tpu_custom_call.1} parent=77 // pred_region
          %372 = dma.done %s365, 1024
        $region86: #{tpu_custom_call.1} parent=77 // pred_fallthru
          _
        %s373 = sand.u32 %s26, 1
        %s374 = scalar_lea.sflag [#allocation8], %s373
        %s375 = sand.u32 %s100, 1
        %s376 = smul.addr %s375, 64
        %s377 = scalar_lea.vmem [#allocation7], %s376
        // Predicated region
        $region87: #{tpu_custom_call.1} parent=77 // pred_check
          %p378 = pneg %p113
        $region88: #{tpu_custom_call.1} parent=77 // pred_check_branch
          %380 = sbr.rel (%p378) target = $region90
        $region89: #{tpu_custom_call.1} parent=77 // pred_region
          %381 = dma.done %s374, 1024
        $region90: #{tpu_custom_call.1} parent=77 // pred_fallthru
          _
        // Predicated region
        $region91: #{tpu_custom_call.1} parent=77 // pred_check
          %p382 = pneg %p160
        $region92: #{tpu_custom_call.1} parent=77 // pred_check_branch
          %384 = sbr.rel (%p382) target = $region94
        $region93: #{tpu_custom_call.1} parent=77 // pred_region
          %385 = dma.done [#allocation8], 2048
        $region94: #{tpu_custom_call.1} parent=77 // pred_fallthru
          _
        %s386 = sand.u32 %s48, 1
        %s387 = sand.u32 %s48, 1
        %s388 = smul.addr %s387, 32
        %s389 = scalar_lea.vmem [#allocation3], %s388
        %p390 = pneg %p61
        %p391 = pneg %p58
        %s392 = sand.u32 %s74, 1
        %s393 = scalar_lea.sflag [#allocation5], %s392
        %s394 = sand.u32 %s74, 1
        %s395 = smul.addr %s394, 64
        %s396 = scalar_lea.vmem [#allocation4], %s395
        %p397 = pneg %p87
        %p398 = pneg %p84
        %s399 = sand.u32 %s26, 1
        %s400 = scalar_lea.sflag [#allocation8], %s399
        %s401 = sand.u32 %s100, 1
        %s402 = smul.addr %s401, 64
        %s403 = scalar_lea.vmem [#allocation7], %s402
        %p404 = pneg %p113
        %p405 = pneg %p110
        %s406 = smul.u32 16, %s30
        %p407 = scmp.lt.s32.totalorder %s406, 47
        %s408 = scalar_select %p407, %s406, 47
        %s409 = smul.addr %s408, 8
        %s410 = scalar_lea.vmem %s3, %s409
        %p411 = pneg %p139
        %p412 = pneg %p136
        %p413 = pneg %p160
        %p414 = pneg %p157
        %p415 = pneg %p181
        %p416 = pneg %p178
        %p417 = pneg %p207
        %p418 = pneg %p204
        %s419 = sand.u32 %s194, 1
        %s420 = scalar_lea.sflag [#allocation6], %s419
        %s421 = sand.u32 %s194, 1
        %s422 = smul.addr %s421, 64
        %s423 = scalar_lea.vmem [#allocation10], %s422
        %s424 = smul.u32 4, %s30
        %s425 = smul.u32 16, %s31
        %s426 = smul.u32 16, %s30
        %s427 = smul.u32 16, %s30
        %p428 = scmp.lt.s32.totalorder %s427, 47
        %s429 = scalar_select %p428, %s427, 47
        %s430 = smul.addr %s429, 8
        %s431 = scalar_lea.vmem %s3, %s430
        %s432 = smul.u32 16, %s30
        %s433 = smul.u32 16, %s30
        %p435 = scmp.eq.s32.totalorder %s31, 0
        // Predicated region
        $region95: #{tpu_custom_call.1} parent=77 // pred_check
          %p436 = pneg %p435
        $region96: #{tpu_custom_call.1} parent=77 // pred_check_branch
          %438 = sbr.rel (%p436) target = $region98
        $region97: #{tpu_custom_call.1} parent=77 // pred_region
          %439 = vst [vmem:[#allocation2] sm:$0xff] 0.0
          %440 = vst [vmem:[#allocation2 + $0x8] sm:$0xff] 0.0
          %441 = vst [vmem:[#allocation2 + $0x10] sm:$0xff] 0.0
          %442 = vst [vmem:[#allocation2 + $0x18] sm:$0xff] 0.0
          %443 = vst [vmem:[#allocation2 + $0x20] sm:$0xff] 0.0
          %444 = vst [vmem:[#allocation2 + $0x28] sm:$0xff] 0.0
          %445 = vst [vmem:[#allocation2 + $0x30] sm:$0xff] 0.0
          %446 = vst [vmem:[#allocation2 + $0x38] sm:$0xff] 0.0
          %447 = vst [vmem:[#allocation2 + $0x40] sm:$0xff] 0.0
          %448 = vst [vmem:[#allocation2 + $0x48] sm:$0xff] 0.0
          %449 = vst [vmem:[#allocation2 + $0x50] sm:$0xff] 0.0
          %450 = vst [vmem:[#allocation2 + $0x58] sm:$0xff] 0.0
          %451 = vst [vmem:[#allocation2 + $0x60] sm:$0xff] 0.0
          %452 = vst [vmem:[#allocation2 + $0x68] sm:$0xff] 0.0
          %453 = vst [vmem:[#allocation2 + $0x70] sm:$0xff] 0.0
          %454 = vst [vmem:[#allocation2 + $0x78] sm:$0xff] 0.0
        $region98: #{tpu_custom_call.1} parent=77 // pred_fallthru
          _
        %v455 = vld [vmem:[%s360] sm:$0xff]
        %v456 = vld [vmem:[%s360 + $0x8] sm:$0xff]
        %v457 = vld [vmem:[%s360 + $0x10] sm:$0xff]
        %v458 = vld [vmem:[%s360 + $0x18] sm:$0xff]
        %v459 = vunpack.c.l.s8.bf16 %v455
        %v460 = vunpack.c.h.s8.bf16 %v455
        %v461 = vunpack.c.l.s8.bf16 %v456
        %v462 = vunpack.c.h.s8.bf16 %v456
        %v463 = vunpack.c.l.s8.bf16 %v457
        %v464 = vunpack.c.h.s8.bf16 %v457
        %v465 = vunpack.c.l.s8.bf16 %v458
        %v466 = vunpack.c.h.s8.bf16 %v458
        %v467 = vld [vmem:[#allocation2] sm:$0xff]
        %v468 = vld [vmem:[#allocation2 + $0x8] sm:$0xff]
        %v469 = vld [vmem:[#allocation2 + $0x10] sm:$0xff]
        %v470 = vld [vmem:[#allocation2 + $0x18] sm:$0xff]
        %v471 = vld [vmem:[#allocation2 + $0x20] sm:$0xff]
        %v472 = vld [vmem:[#allocation2 + $0x28] sm:$0xff]
        %v473 = vld [vmem:[#allocation2 + $0x30] sm:$0xff]
        %v474 = vld [vmem:[#allocation2 + $0x38] sm:$0xff]
        %v475 = vld [vmem:[#allocation2 + $0x40] sm:$0xff]
        %v476 = vld [vmem:[#allocation2 + $0x48] sm:$0xff]
        %v477 = vld [vmem:[#allocation2 + $0x50] sm:$0xff]
        %v478 = vld [vmem:[#allocation2 + $0x58] sm:$0xff]
        %v479 = vld [vmem:[#allocation2 + $0x60] sm:$0xff]
        %v480 = vld [vmem:[#allocation2 + $0x68] sm:$0xff]
        %v481 = vld [vmem:[#allocation2 + $0x70] sm:$0xff]
        %v482 = vld [vmem:[#allocation2 + $0x78] sm:$0xff]
        %v483 = vld [vmem:[%s368] sm:$0xf]
        %v484 = vld [vmem:[%s368 + $0x4] sm:$0xf]
        %v485 = vld [vmem:[%s368 + $0x8] sm:$0xf]
        %v486 = vld [vmem:[%s368 + $0xc] sm:$0xf]
        %v487 = vld [vmem:[%s368 + $0x10] sm:$0xf]
        %v488 = vld [vmem:[%s368 + $0x14] sm:$0xf]
        %v489 = vld [vmem:[%s368 + $0x18] sm:$0xf]
        %v490 = vld [vmem:[%s368 + $0x1c] sm:$0xf]
        %v491 = vld [vmem:[%s368 + $0x20] sm:$0xf]
        %v492 = vld [vmem:[%s368 + $0x24] sm:$0xf]
        %v493 = vld [vmem:[%s368 + $0x28] sm:$0xf]
        %v494 = vld [vmem:[%s368 + $0x2c] sm:$0xf]
        %v495 = vld [vmem:[%s368 + $0x30] sm:$0xf]
        %v496 = vld [vmem:[%s368 + $0x34] sm:$0xf]
        %v497 = vld [vmem:[%s368 + $0x38] sm:$0xf]
        %v498 = vld [vmem:[%s368 + $0x3c] sm:$0xf]
        %v515 = vunpack.c.l.b16 %v483
        %v516 = vunpack.c.l.b16 %v484
        %v517 = vunpack.c.l.b16 %v485
        %v518 = vunpack.c.l.b16 %v486
        %v519 = vunpack.c.l.b16 %v487
        %v520 = vunpack.c.l.b16 %v488
        %v521 = vunpack.c.l.b16 %v489
        %v522 = vunpack.c.l.b16 %v490
        %v523 = vunpack.c.l.b16 %v491
        %v524 = vunpack.c.l.b16 %v492
        %v525 = vunpack.c.l.b16 %v493
        %v526 = vunpack.c.l.b16 %v494
        %v527 = vunpack.c.l.b16 %v495
        %v528 = vunpack.c.l.b16 %v496
        %v529 = vunpack.c.l.b16 %v497
        %v530 = vunpack.c.l.b16 %v498
        %v531 = vpack.c.b16 %v516, %v515
        %v532 = vpack.c.b16 %v518, %v517
        %v533 = vpack.c.b16 %v520, %v519
        %v534 = vpack.c.b16 %v522, %v521
        %v535 = vpack.c.b16 %v524, %v523
        %v536 = vpack.c.b16 %v526, %v525
        %v537 = vpack.c.b16 %v528, %v527
        %v538 = vpack.c.b16 %v530, %v529
        %547 = vmatprep.subr.bf16.mxu0 0
        %548 = vmatpush1.bf16.msra.mxu0 %v538
        %549 = vmatprep.subr.bf16.mxu0 0
        %550 = vmatpush1.bf16.msra.mxu0 %v537
        %551 = vmatprep.subr.bf16.mxu0 0
        %552 = vmatpush1.bf16.msra.mxu0 %v536
        %553 = vmatprep.subr.bf16.mxu0 0
        %554 = vmatpush1.bf16.msra.mxu0 %v535
        %555 = vmatprep.subr.bf16.mxu0 0
        %556 = vmatpush1.bf16.msra.mxu0 %v534
        %557 = vmatprep.subr.bf16.mxu0 0
        %558 = vmatpush1.bf16.msra.mxu0 %v533
        %559 = vmatprep.subr.bf16.mxu0 0
        %560 = vmatpush1.bf16.msra.mxu0 %v532
        %561 = vmatprep.subr.bf16.mxu0 0
        %562 = vmatpush1.bf16.msra.mxu0 %v531
        %563 = vmatprep.subr.bf16.mxu0 0
        %564 = vmatpush2.bf16.msra.mxu0 0
        %565 = vmatprep.subr.bf16.mxu0 0
        %566 = vmatpush2.bf16.msra.mxu0 0
        %567 = vmatprep.subr.bf16.mxu0 0
        %568 = vmatpush2.bf16.msra.mxu0 0
        %569 = vmatprep.subr.bf16.mxu0 0
        %570 = vmatpush2.bf16.msra.mxu0 0
        %571 = vmatprep.subr.bf16.mxu0 0
        %572 = vmatpush2.bf16.msra.mxu0 0
        %573 = vmatprep.subr.bf16.mxu0 0
        %574 = vmatpush2.bf16.msra.mxu0 0
        %575 = vmatprep.subr.bf16.mxu0 0
        %576 = vmatpush2.bf16.msra.mxu0 0
        %577 = vmatprep.subr.bf16.mxu0 0
        %578 = vmatpush2.bf16.msra.mxu0 0
        %579 = vmatprep.mubr.bf16.mxu0 0
        %580 = vmatmul.mubr.bf16.gmra.mxu0 %v459
        %v581 = vpop.f32.mrf.mxu0
        %v582 = vadd.f32 0.0, %v581
        %v583 = vpop.f32.mrf.mxu0
        %v584 = vpop.f32.mrf.mxu0
        %v585 = vadd.f32 0.0, %v584
        %v586 = vpop.f32.mrf.mxu0
        %587 = vmatprep.mubr.bf16.mxu0 0
        %588 = vmatmul.mubr.bf16.gmra.mxu0 %v460
        %v589 = vpop.f32.mrf.mxu0
        %v590 = vadd.f32 0.0, %v589
        %v591 = vpop.f32.mrf.mxu0
        %v592 = vpop.f32.mrf.mxu0
        %v593 = vadd.f32 0.0, %v592
        %v594 = vpop.f32.mrf.mxu0
        %595 = vmatprep.mubr.bf16.mxu0 0
        %596 = vmatmul.mubr.bf16.gmra.mxu0 %v461
        %v597 = vpop.f32.mrf.mxu0
        %v598 = vadd.f32 0.0, %v597
        %v599 = vpop.f32.mrf.mxu0
        %v600 = vpop.f32.mrf.mxu0
        %v601 = vadd.f32 0.0, %v600
        %v602 = vpop.f32.mrf.mxu0
        %603 = vmatprep.mubr.bf16.mxu0 0
        %604 = vmatmul.mubr.bf16.gmra.mxu0 %v462
        %v605 = vpop.f32.mrf.mxu0
        %v606 = vadd.f32 0.0, %v605
        %v607 = vpop.f32.mrf.mxu0
        %v608 = vpop.f32.mrf.mxu0
        %v609 = vadd.f32 0.0, %v608
        %v610 = vpop.f32.mrf.mxu0
        %611 = vmatprep.mubr.bf16.mxu0 0
        %612 = vmatmul.mubr.bf16.gmra.mxu0 %v463
        %v613 = vpop.f32.mrf.mxu0
        %v614 = vadd.f32 0.0, %v613
        %v615 = vpop.f32.mrf.mxu0
        %v616 = vpop.f32.mrf.mxu0
        %v617 = vadd.f32 0.0, %v616
        %v618 = vpop.f32.mrf.mxu0
        %619 = vmatprep.mubr.bf16.mxu0 0
        %620 = vmatmul.mubr.bf16.gmra.mxu0 %v464
        %v621 = vpop.f32.mrf.mxu0
        %v622 = vadd.f32 0.0, %v621
        %v623 = vpop.f32.mrf.mxu0
        %v624 = vpop.f32.mrf.mxu0
        %v625 = vadd.f32 0.0, %v624
        %v626 = vpop.f32.mrf.mxu0
        %627 = vmatprep.mubr.bf16.mxu0 0
        %628 = vmatmul.mubr.bf16.gmra.mxu0 %v465
        %v629 = vpop.f32.mrf.mxu0
        %v630 = vadd.f32 0.0, %v629
        %v631 = vpop.f32.mrf.mxu0
        %v632 = vpop.f32.mrf.mxu0
        %v633 = vadd.f32 0.0, %v632
        %v634 = vpop.f32.mrf.mxu0
        %635 = vmatprep.mubr.bf16.mxu0 0
        %636 = vmatmul.mubr.bf16.gmra.mxu0 %v466
        %v637 = vpop.f32.mrf.mxu0
        %v638 = vadd.f32 0.0, %v637
        %v639 = vpop.f32.mrf.mxu0
        %v640 = vpop.f32.mrf.mxu0
        %v641 = vadd.f32 0.0, %v640
        %v642 = vpop.f32.mrf.mxu0
        %643 = vdwg.mxu0
        %v644 = vadd.f32 %v467, %v582
        %v645 = vadd.f32 %v468, %v585
        %v646 = vadd.f32 %v469, %v590
        %v647 = vadd.f32 %v470, %v593
        %v648 = vadd.f32 %v471, %v598
        %v649 = vadd.f32 %v472, %v601
        %v650 = vadd.f32 %v473, %v606
        %v651 = vadd.f32 %v474, %v609
        %v652 = vadd.f32 %v475, %v614
        %v653 = vadd.f32 %v476, %v617
        %v654 = vadd.f32 %v477, %v622
        %v655 = vadd.f32 %v478, %v625
        %v656 = vadd.f32 %v479, %v630
        %v657 = vadd.f32 %v480, %v633
        %v658 = vadd.f32 %v481, %v638
        %v659 = vadd.f32 %v482, %v641
        %660 = vst [vmem:[#allocation2] sm:$0xff] %v644
        %661 = vst [vmem:[#allocation2 + $0x8] sm:$0xff] %v645
        %662 = vst [vmem:[#allocation2 + $0x10] sm:$0xff] %v646
        %663 = vst [vmem:[#allocation2 + $0x18] sm:$0xff] %v647
        %664 = vst [vmem:[#allocation2 + $0x20] sm:$0xff] %v648
        %665 = vst [vmem:[#allocation2 + $0x28] sm:$0xff] %v649
        %666 = vst [vmem:[#allocation2 + $0x30] sm:$0xff] %v650
        %667 = vst [vmem:[#allocation2 + $0x38] sm:$0xff] %v651
        %668 = vst [vmem:[#allocation2 + $0x40] sm:$0xff] %v652
        %669 = vst [vmem:[#allocation2 + $0x48] sm:$0xff] %v653
        %670 = vst [vmem:[#allocation2 + $0x50] sm:$0xff] %v654
        %671 = vst [vmem:[#allocation2 + $0x58] sm:$0xff] %v655
        %672 = vst [vmem:[#allocation2 + $0x60] sm:$0xff] %v656
        %673 = vst [vmem:[#allocation2 + $0x68] sm:$0xff] %v657
        %674 = vst [vmem:[#allocation2 + $0x70] sm:$0xff] %v658
        %675 = vst [vmem:[#allocation2 + $0x78] sm:$0xff] %v659
        %p676 = scmp.eq.s32.totalorder %s31, 2
        // Predicated region
        $region99: #{tpu_custom_call.1} parent=77 // pred_check
          %p677 = pneg %p676
        $region100: #{tpu_custom_call.1} parent=77 // pred_check_branch
          %679 = sbr.rel (%p677) target = $region102
        $region101: #{tpu_custom_call.1} parent=77 // pred_region
          %v680 = vld [vmem:[#allocation2] sm:$0xff]
          %v681 = vld [vmem:[#allocation2 + $0x8] sm:$0xff]
          %v682 = vld [vmem:[#allocation2 + $0x10] sm:$0xff]
          %v683 = vld [vmem:[#allocation2 + $0x18] sm:$0xff]
          %v684 = vld [vmem:[#allocation2 + $0x20] sm:$0xff]
          %v685 = vld [vmem:[#allocation2 + $0x28] sm:$0xff]
          %v686 = vld [vmem:[#allocation2 + $0x30] sm:$0xff]
          %v687 = vld [vmem:[#allocation2 + $0x38] sm:$0xff]
          %v688 = vld [vmem:[#allocation2 + $0x40] sm:$0xff]
          %v689 = vld [vmem:[#allocation2 + $0x48] sm:$0xff]
          %v690 = vld [vmem:[#allocation2 + $0x50] sm:$0xff]
          %v691 = vld [vmem:[#allocation2 + $0x58] sm:$0xff]
          %v692 = vld [vmem:[#allocation2 + $0x60] sm:$0xff]
          %v693 = vld [vmem:[#allocation2 + $0x68] sm:$0xff]
          %v694 = vld [vmem:[#allocation2 + $0x70] sm:$0xff]
          %v695 = vld [vmem:[#allocation2 + $0x78] sm:$0xff]
          %v696 = vld [vmem:[%s431] sm:$0xff]
          %v697 = vld [vmem:[%s431 + $0x8] sm:$0xff]
          %v698 = vld [vmem:[%s431 + $0x10] sm:$0xff]
          %v699 = vld [vmem:[%s431 + $0x18] sm:$0xff]
          %v700 = vld [vmem:[%s431 + $0x20] sm:$0xff]
          %v701 = vld [vmem:[%s431 + $0x28] sm:$0xff]
          %v702 = vld [vmem:[%s431 + $0x30] sm:$0xff]
          %v703 = vld [vmem:[%s431 + $0x38] sm:$0xff]
          %v704 = vld [vmem:[%s431 + $0x40] sm:$0xff]
          %v705 = vld [vmem:[%s431 + $0x48] sm:$0xff]
          %v706 = vld [vmem:[%s431 + $0x50] sm:$0xff]
          %v707 = vld [vmem:[%s431 + $0x58] sm:$0xff]
          %v708 = vld [vmem:[%s431 + $0x60] sm:$0xff]
          %v709 = vld [vmem:[%s431 + $0x68] sm:$0xff]
          %v710 = vld [vmem:[%s431 + $0x70] sm:$0xff]
          %v711 = vld [vmem:[%s431 + $0x78] sm:$0xff]
          %713 = vset.pattern.permute.xlu0 0
          %714 = vperm.xlu0 %713, %v696
          %v715 = vpop.permute.xlu0 %714
          %718 = vset.pattern.permute.xlu0 0
          %719 = vperm.xlu0 %718, %v697
          %v720 = vpop.permute.xlu0 %719
          %723 = vset.pattern.permute.xlu0 0
          %724 = vperm.xlu0 %723, %v698
          %v725 = vpop.permute.xlu0 %724
          %728 = vset.pattern.permute.xlu0 0
          %729 = vperm.xlu0 %728, %v699
          %v730 = vpop.permute.xlu0 %729
          %733 = vset.pattern.permute.xlu0 0
          %734 = vperm.xlu0 %733, %v700
          %v735 = vpop.permute.xlu0 %734
          %738 = vset.pattern.permute.xlu0 0
          %739 = vperm.xlu0 %738, %v701
          %v740 = vpop.permute.xlu0 %739
          %743 = vset.pattern.permute.xlu0 0
          %744 = vperm.xlu0 %743, %v702
          %v745 = vpop.permute.xlu0 %744
          %748 = vset.pattern.permute.xlu0 0
          %749 = vperm.xlu0 %748, %v703
          %v750 = vpop.permute.xlu0 %749
          %753 = vset.pattern.permute.xlu0 0
          %754 = vperm.xlu0 %753, %v704
          %v755 = vpop.permute.xlu0 %754
          %758 = vset.pattern.permute.xlu0 0
          %759 = vperm.xlu0 %758, %v705
          %v760 = vpop.permute.xlu0 %759
          %763 = vset.pattern.permute.xlu0 0
          %764 = vperm.xlu0 %763, %v706
          %v765 = vpop.permute.xlu0 %764
          %768 = vset.pattern.permute.xlu0 0
          %769 = vperm.xlu0 %768, %v707
          %v770 = vpop.permute.xlu0 %769
          %773 = vset.pattern.permute.xlu0 0
          %774 = vperm.xlu0 %773, %v708
          %v775 = vpop.permute.xlu0 %774
          %778 = vset.pattern.permute.xlu0 0
          %779 = vperm.xlu0 %778, %v709
          %v780 = vpop.permute.xlu0 %779
          %783 = vset.pattern.permute.xlu0 0
          %784 = vperm.xlu0 %783, %v710
          %v785 = vpop.permute.xlu0 %784
          %788 = vset.pattern.permute.xlu0 0
          %789 = vperm.xlu0 %788, %v711
          %v790 = vpop.permute.xlu0 %789
          %v792 = vmul.f32 %v680, %v715
          %v793 = vmul.f32 %v681, %v720
          %v794 = vmul.f32 %v682, %v725
          %v795 = vmul.f32 %v683, %v730
          %v796 = vmul.f32 %v684, %v735
          %v797 = vmul.f32 %v685, %v740
          %v798 = vmul.f32 %v686, %v745
          %v799 = vmul.f32 %v687, %v750
          %v800 = vmul.f32 %v688, %v755
          %v801 = vmul.f32 %v689, %v760
          %v802 = vmul.f32 %v690, %v765
          %v803 = vmul.f32 %v691, %v770
          %v804 = vmul.f32 %v692, %v775
          %v805 = vmul.f32 %v693, %v780
          %v806 = vmul.f32 %v694, %v785
          %v807 = vmul.f32 %v695, %v790
          %v808 = vpack.c.bf16 %v793, %v792
          %v809 = vpack.c.bf16 %v795, %v794
          %v810 = vpack.c.bf16 %v797, %v796
          %v811 = vpack.c.bf16 %v799, %v798
          %v812 = vpack.c.bf16 %v801, %v800
          %v813 = vpack.c.bf16 %v803, %v802
          %v814 = vpack.c.bf16 %v805, %v804
          %v815 = vpack.c.bf16 %v807, %v806
          %v816 = vld [vmem:[#allocation9] sm:$0xf]
          %v817 = vld [vmem:[#allocation9 + $0x4] sm:$0xf]
          %v818 = vld [vmem:[#allocation9 + $0x8] sm:$0xf]
          %v819 = vld [vmem:[#allocation9 + $0xc] sm:$0xf]
          %v820 = vld [vmem:[#allocation9 + $0x10] sm:$0xf]
          %v821 = vld [vmem:[#allocation9 + $0x14] sm:$0xf]
          %v822 = vld [vmem:[#allocation9 + $0x18] sm:$0xf]
          %v823 = vld [vmem:[#allocation9 + $0x1c] sm:$0xf]
          %v824 = vld [vmem:[#allocation9 + $0x20] sm:$0xf]
          %v825 = vld [vmem:[#allocation9 + $0x24] sm:$0xf]
          %v826 = vld [vmem:[#allocation9 + $0x28] sm:$0xf]
          %v827 = vld [vmem:[#allocation9 + $0x2c] sm:$0xf]
          %v828 = vld [vmem:[#allocation9 + $0x30] sm:$0xf]
          %v829 = vld [vmem:[#allocation9 + $0x34] sm:$0xf]
          %v830 = vld [vmem:[#allocation9 + $0x38] sm:$0xf]
          %v831 = vld [vmem:[#allocation9 + $0x3c] sm:$0xf]
          %v832 = vld [vmem:[%s377] sm:$0xf]
          %v833 = vld [vmem:[%s377 + $0x4] sm:$0xf]
          %v834 = vld [vmem:[%s377 + $0x8] sm:$0xf]
          %v835 = vld [vmem:[%s377 + $0xc] sm:$0xf]
          %v836 = vld [vmem:[%s377 + $0x10] sm:$0xf]
          %v837 = vld [vmem:[%s377 + $0x14] sm:$0xf]
          %v838 = vld [vmem:[%s377 + $0x18] sm:$0xf]
          %v839 = vld [vmem:[%s377 + $0x1c] sm:$0xf]
          %v840 = vld [vmem:[%s377 + $0x20] sm:$0xf]
          %v841 = vld [vmem:[%s377 + $0x24] sm:$0xf]
          %v842 = vld [vmem:[%s377 + $0x28] sm:$0xf]
          %v843 = vld [vmem:[%s377 + $0x2c] sm:$0xf]
          %v844 = vld [vmem:[%s377 + $0x30] sm:$0xf]
          %v845 = vld [vmem:[%s377 + $0x34] sm:$0xf]
          %v846 = vld [vmem:[%s377 + $0x38] sm:$0xf]
          %v847 = vld [vmem:[%s377 + $0x3c] sm:$0xf]
          %v848 = vld [vmem:[#allocation9 + $0x40] sm:$0xf]
          %v849 = vld [vmem:[#allocation9 + $0x44] sm:$0xf]
          %v850 = vld [vmem:[#allocation9 + $0x48] sm:$0xf]
          %v851 = vld [vmem:[#allocation9 + $0x4c] sm:$0xf]
          %v852 = vld [vmem:[#allocation9 + $0x50] sm:$0xf]
          %v853 = vld [vmem:[#allocation9 + $0x54] sm:$0xf]
          %v854 = vld [vmem:[#allocation9 + $0x58] sm:$0xf]
          %v855 = vld [vmem:[#allocation9 + $0x5c] sm:$0xf]
          %v856 = vld [vmem:[#allocation9 + $0x60] sm:$0xf]
          %v857 = vld [vmem:[#allocation9 + $0x64] sm:$0xf]
          %v858 = vld [vmem:[#allocation9 + $0x68] sm:$0xf]
          %v859 = vld [vmem:[#allocation9 + $0x6c] sm:$0xf]
          %v860 = vld [vmem:[#allocation9 + $0x70] sm:$0xf]
          %v861 = vld [vmem:[#allocation9 + $0x74] sm:$0xf]
          %v862 = vld [vmem:[#allocation9 + $0x78] sm:$0xf]
          %v863 = vld [vmem:[#allocation9 + $0x7c] sm:$0xf]
          %v880 = vunpack.c.l.b16 %v832
          %v881 = vunpack.c.l.b16 %v833
          %v882 = vunpack.c.l.b16 %v834
          %v883 = vunpack.c.l.b16 %v835
          %v884 = vunpack.c.l.b16 %v836
          %v885 = vunpack.c.l.b16 %v837
          %v886 = vunpack.c.l.b16 %v838
          %v887 = vunpack.c.l.b16 %v839
          %v888 = vunpack.c.l.b16 %v840
          %v889 = vunpack.c.l.b16 %v841
          %v890 = vunpack.c.l.b16 %v842
          %v891 = vunpack.c.l.b16 %v843
          %v892 = vunpack.c.l.b16 %v844
          %v893 = vunpack.c.l.b16 %v845
          %v894 = vunpack.c.l.b16 %v846
          %v895 = vunpack.c.l.b16 %v847
          %v896 = vpack.c.b16 %v881, %v880
          %v897 = vpack.c.b16 %v883, %v882
          %v898 = vpack.c.b16 %v885, %v884
          %v899 = vpack.c.b16 %v887, %v886
          %v900 = vpack.c.b16 %v889, %v888
          %v901 = vpack.c.b16 %v891, %v890
          %v902 = vpack.c.b16 %v893, %v892
          %v903 = vpack.c.b16 %v895, %v894
          %v928 = vunpack.c.l.b16 %v848
          %v929 = vunpack.c.l.b16 %v849
          %v930 = vunpack.c.l.b16 %v850
          %v931 = vunpack.c.l.b16 %v851
          %v932 = vunpack.c.l.b16 %v852
          %v933 = vunpack.c.l.b16 %v853
          %v934 = vunpack.c.l.b16 %v854
          %v935 = vunpack.c.l.b16 %v855
          %v936 = vunpack.c.l.b16 %v856
          %v937 = vunpack.c.l.b16 %v857
          %v938 = vunpack.c.l.b16 %v858
          %v939 = vunpack.c.l.b16 %v859
          %v940 = vunpack.c.l.b16 %v860
          %v941 = vunpack.c.l.b16 %v861
          %v942 = vunpack.c.l.b16 %v862
          %v943 = vunpack.c.l.b16 %v863
          %v944 = vpack.c.b16 %v929, %v928
          %v945 = vpack.c.b16 %v931, %v930
          %v946 = vpack.c.b16 %v933, %v932
          %v947 = vpack.c.b16 %v935, %v934
          %v948 = vpack.c.b16 %v937, %v936
          %v949 = vpack.c.b16 %v939, %v938
          %v950 = vpack.c.b16 %v941, %v940
          %v951 = vpack.c.b16 %v943, %v942
          %960 = vmatprep.subr.bf16.mxu0 0
          %961 = vmatpush1.bf16.msra.mxu0 %v951
          %962 = vmatprep.subr.bf16.mxu0 0
          %963 = vmatpush1.bf16.msra.mxu0 %v950
          %964 = vmatprep.subr.bf16.mxu0 0
          %965 = vmatpush1.bf16.msra.mxu0 %v949
          %966 = vmatprep.subr.bf16.mxu0 0
          %967 = vmatpush1.bf16.msra.mxu0 %v948
          %968 = vmatprep.subr.bf16.mxu0 0
          %969 = vmatpush1.bf16.msra.mxu0 %v947
          %970 = vmatprep.subr.bf16.mxu0 0
          %971 = vmatpush1.bf16.msra.mxu0 %v946
          %972 = vmatprep.subr.bf16.mxu0 0
          %973 = vmatpush1.bf16.msra.mxu0 %v945
          %974 = vmatprep.subr.bf16.mxu0 0
          %975 = vmatpush1.bf16.msra.mxu0 %v944
          %976 = vmatprep.subr.bf16.mxu0 0
          %977 = vmatpush2.bf16.msra.mxu0 0
          %978 = vmatprep.subr.bf16.mxu0 0
          %979 = vmatpush2.bf16.msra.mxu0 0
          %980 = vmatprep.subr.bf16.mxu0 0
          %981 = vmatpush2.bf16.msra.mxu0 0
          %982 = vmatprep.subr.bf16.mxu0 0
          %983 = vmatpush2.bf16.msra.mxu0 0
          %984 = vmatprep.subr.bf16.mxu0 0
          %985 = vmatpush2.bf16.msra.mxu0 0
          %986 = vmatprep.subr.bf16.mxu0 0
          %987 = vmatpush2.bf16.msra.mxu0 0
          %988 = vmatprep.subr.bf16.mxu0 0
          %989 = vmatpush2.bf16.msra.mxu0 0
          %990 = vmatprep.subr.bf16.mxu0 0
          %991 = vmatpush2.bf16.msra.mxu0 0
          %992 = vmatprep.mubr.bf16.mxu0 0
          %993 = vmatmul.mubr.bf16.gmra.mxu0 %v896
          %v994 = vpop.f32.mrf.mxu0
          %v995 = vadd.f32 0.0, %v994
          %v996 = vpop.f32.mrf.mxu0
          %v997 = vpop.f32.mrf.mxu0
          %v998 = vadd.f32 0.0, %v997
          %v999 = vpop.f32.mrf.mxu0
          %1000 = vmatprep.mubr.bf16.mxu0 0
          %1001 = vmatmul.mubr.bf16.gmra.mxu0 %v897
          %v1002 = vpop.f32.mrf.mxu0
          %v1003 = vadd.f32 0.0, %v1002
          %v1004 = vpop.f32.mrf.mxu0
          %v1005 = vpop.f32.mrf.mxu0
          %v1006 = vadd.f32 0.0, %v1005
          %v1007 = vpop.f32.mrf.mxu0
          %1008 = vmatprep.mubr.bf16.mxu0 0
          %1009 = vmatmul.mubr.bf16.gmra.mxu0 %v898
          %v1010 = vpop.f32.mrf.mxu0
          %v1011 = vadd.f32 0.0, %v1010
          %v1012 = vpop.f32.mrf.mxu0
          %v1013 = vpop.f32.mrf.mxu0
          %v1014 = vadd.f32 0.0, %v1013
          %v1015 = vpop.f32.mrf.mxu0
          %1016 = vmatprep.mubr.bf16.mxu0 0
          %1017 = vmatmul.mubr.bf16.gmra.mxu0 %v899
          %v1018 = vpop.f32.mrf.mxu0
          %v1019 = vadd.f32 0.0, %v1018
          %v1020 = vpop.f32.mrf.mxu0
          %v1021 = vpop.f32.mrf.mxu0
          %v1022 = vadd.f32 0.0, %v1021
          %v1023 = vpop.f32.mrf.mxu0
          %1024 = vmatprep.mubr.bf16.mxu0 0
          %1025 = vmatmul.mubr.bf16.gmra.mxu0 %v900
          %v1026 = vpop.f32.mrf.mxu0
          %v1027 = vadd.f32 0.0, %v1026
          %v1028 = vpop.f32.mrf.mxu0
          %v1029 = vpop.f32.mrf.mxu0
          %v1030 = vadd.f32 0.0, %v1029
          %v1031 = vpop.f32.mrf.mxu0
          %1032 = vmatprep.mubr.bf16.mxu0 0
          %1033 = vmatmul.mubr.bf16.gmra.mxu0 %v901
          %v1034 = vpop.f32.mrf.mxu0
          %v1035 = vadd.f32 0.0, %v1034
          %v1036 = vpop.f32.mrf.mxu0
          %v1037 = vpop.f32.mrf.mxu0
          %v1038 = vadd.f32 0.0, %v1037
          %v1039 = vpop.f32.mrf.mxu0
          %1040 = vmatprep.mubr.bf16.mxu0 0
          %1041 = vmatmul.mubr.bf16.gmra.mxu0 %v902
          %v1042 = vpop.f32.mrf.mxu0
          %v1043 = vadd.f32 0.0, %v1042
          %v1044 = vpop.f32.mrf.mxu0
          %v1045 = vpop.f32.mrf.mxu0
          %v1046 = vadd.f32 0.0, %v1045
          %v1047 = vpop.f32.mrf.mxu0
          %1048 = vmatprep.mubr.bf16.mxu0 0
          %1049 = vmatmul.mubr.bf16.gmra.mxu0 %v903
          %v1050 = vpop.f32.mrf.mxu0
          %v1051 = vadd.f32 0.0, %v1050
          %v1052 = vpop.f32.mrf.mxu0
          %v1053 = vpop.f32.mrf.mxu0
          %v1054 = vadd.f32 0.0, %v1053
          %v1055 = vpop.f32.mrf.mxu0
          %1056 = vdwg.mxu0
          %v1073 = vunpack.c.l.b16 %v816
          %v1074 = vunpack.c.l.b16 %v817
          %v1075 = vunpack.c.l.b16 %v818
          %v1076 = vunpack.c.l.b16 %v819
          %v1077 = vunpack.c.l.b16 %v820
          %v1078 = vunpack.c.l.b16 %v821
          %v1079 = vunpack.c.l.b16 %v822
          %v1080 = vunpack.c.l.b16 %v823
          %v1081 = vunpack.c.l.b16 %v824
          %v1082 = vunpack.c.l.b16 %v825
          %v1083 = vunpack.c.l.b16 %v826
          %v1084 = vunpack.c.l.b16 %v827
          %v1085 = vunpack.c.l.b16 %v828
          %v1086 = vunpack.c.l.b16 %v829
          %v1087 = vunpack.c.l.b16 %v830
          %v1088 = vunpack.c.l.b16 %v831
          %v1089 = vpack.c.b16 %v1074, %v1073
          %v1090 = vpack.c.b16 %v1076, %v1075
          %v1091 = vpack.c.b16 %v1078, %v1077
          %v1092 = vpack.c.b16 %v1080, %v1079
          %v1093 = vpack.c.b16 %v1082, %v1081
          %v1094 = vpack.c.b16 %v1084, %v1083
          %v1095 = vpack.c.b16 %v1086, %v1085
          %v1096 = vpack.c.b16 %v1088, %v1087
          %1105 = vmatprep.subr.bf16.mxu0 0
          %1106 = vmatpush1.bf16.msra.mxu0 %v1096
          %1107 = vmatprep.subr.bf16.mxu0 0
          %1108 = vmatpush1.bf16.msra.mxu0 %v1095
          %1109 = vmatprep.subr.bf16.mxu0 0
          %1110 = vmatpush1.bf16.msra.mxu0 %v1094
          %1111 = vmatprep.subr.bf16.mxu0 0
          %1112 = vmatpush1.bf16.msra.mxu0 %v1093
          %1113 = vmatprep.subr.bf16.mxu0 0
          %1114 = vmatpush1.bf16.msra.mxu0 %v1092
          %1115 = vmatprep.subr.bf16.mxu0 0
          %1116 = vmatpush1.bf16.msra.mxu0 %v1091
          %1117 = vmatprep.subr.bf16.mxu0 0
          %1118 = vmatpush1.bf16.msra.mxu0 %v1090
          %1119 = vmatprep.subr.bf16.mxu0 0
          %1120 = vmatpush1.bf16.msra.mxu0 %v1089
          %1121 = vmatprep.subr.bf16.mxu0 0
          %1122 = vmatpush2.bf16.msra.mxu0 0
          %1123 = vmatprep.subr.bf16.mxu0 0
          %1124 = vmatpush2.bf16.msra.mxu0 0
          %1125 = vmatprep.subr.bf16.mxu0 0
          %1126 = vmatpush2.bf16.msra.mxu0 0
          %1127 = vmatprep.subr.bf16.mxu0 0
          %1128 = vmatpush2.bf16.msra.mxu0 0
          %1129 = vmatprep.subr.bf16.mxu0 0
          %1130 = vmatpush2.bf16.msra.mxu0 0
          %1131 = vmatprep.subr.bf16.mxu0 0
          %1132 = vmatpush2.bf16.msra.mxu0 0
          %1133 = vmatprep.subr.bf16.mxu0 0
          %1134 = vmatpush2.bf16.msra.mxu0 0
          %1135 = vmatprep.subr.bf16.mxu0 0
          %1136 = vmatpush2.bf16.msra.mxu0 0
          %1137 = vmatprep.mubr.bf16.mxu0 0
          %1138 = vmatmul.mubr.bf16.gmra.mxu0 %v808
          %v1139 = vpop.f32.mrf.mxu0
          %v1140 = vadd.f32 %v995, %v1139
          %v1141 = vpop.f32.mrf.mxu0
          %v1142 = vpop.f32.mrf.mxu0
          %v1143 = vadd.f32 %v998, %v1142
          %v1144 = vpop.f32.mrf.mxu0
          %1145 = vmatprep.mubr.bf16.mxu0 0
          %1146 = vmatmul.mubr.bf16.gmra.mxu0 %v809
          %v1147 = vpop.f32.mrf.mxu0
          %v1148 = vadd.f32 %v1003, %v1147
          %v1149 = vpop.f32.mrf.mxu0
          %v1150 = vpop.f32.mrf.mxu0
          %v1151 = vadd.f32 %v1006, %v1150
          %v1152 = vpop.f32.mrf.mxu0
          %1153 = vmatprep.mubr.bf16.mxu0 0
          %1154 = vmatmul.mubr.bf16.gmra.mxu0 %v810
          %v1155 = vpop.f32.mrf.mxu0
          %v1156 = vadd.f32 %v1011, %v1155
          %v1157 = vpop.f32.mrf.mxu0
          %v1158 = vpop.f32.mrf.mxu0
          %v1159 = vadd.f32 %v1014, %v1158
          %v1160 = vpop.f32.mrf.mxu0
          %1161 = vmatprep.mubr.bf16.mxu0 0
          %1162 = vmatmul.mubr.bf16.gmra.mxu0 %v811
          %v1163 = vpop.f32.mrf.mxu0
          %v1164 = vadd.f32 %v1019, %v1163
          %v1165 = vpop.f32.mrf.mxu0
          %v1166 = vpop.f32.mrf.mxu0
          %v1167 = vadd.f32 %v1022, %v1166
          %v1168 = vpop.f32.mrf.mxu0
          %1169 = vmatprep.mubr.bf16.mxu0 0
          %1170 = vmatmul.mubr.bf16.gmra.mxu0 %v812
          %v1171 = vpop.f32.mrf.mxu0
          %v1172 = vadd.f32 %v1027, %v1171
          %v1173 = vpop.f32.mrf.mxu0
          %v1174 = vpop.f32.mrf.mxu0
          %v1175 = vadd.f32 %v1030, %v1174
          %v1176 = vpop.f32.mrf.mxu0
          %1177 = vmatprep.mubr.bf16.mxu0 0
          %1178 = vmatmul.mubr.bf16.gmra.mxu0 %v813
          %v1179 = vpop.f32.mrf.mxu0
          %v1180 = vadd.f32 %v1035, %v1179
          %v1181 = vpop.f32.mrf.mxu0
          %v1182 = vpop.f32.mrf.mxu0
          %v1183 = vadd.f32 %v1038, %v1182
          %v1184 = vpop.f32.mrf.mxu0
          %1185 = vmatprep.mubr.bf16.mxu0 0
          %1186 = vmatmul.mubr.bf16.gmra.mxu0 %v814
          %v1187 = vpop.f32.mrf.mxu0
          %v1188 = vadd.f32 %v1043, %v1187
          %v1189 = vpop.f32.mrf.mxu0
          %v1190 = vpop.f32.mrf.mxu0
          %v1191 = vadd.f32 %v1046, %v1190
          %v1192 = vpop.f32.mrf.mxu0
          %1193 = vmatprep.mubr.bf16.mxu0 0
          %1194 = vmatmul.mubr.bf16.gmra.mxu0 %v815
          %v1195 = vpop.f32.mrf.mxu0
          %v1196 = vadd.f32 %v1051, %v1195
          %v1197 = vpop.f32.mrf.mxu0
          %v1198 = vpop.f32.mrf.mxu0
          %v1199 = vadd.f32 %v1054, %v1198
          %v1200 = vpop.f32.mrf.mxu0
          %1201 = vdwg.mxu0
          %v1202 = vld [vmem:[%s5] sm:$0x1]
          %v1204 = vlaneseq
          %v1205 = vshrl.u32 %v1204, 7
          %v1206 = vsub.s32 0, %v1205
          %v1207 = vrot.slane %v1202, %v1206
          %v1209 = vadd.f32 %v1140, %v1207
          %v1210 = vadd.f32 %v1143, %v1207
          %v1211 = vadd.f32 %v1148, %v1207
          %v1212 = vadd.f32 %v1151, %v1207
          %v1213 = vadd.f32 %v1156, %v1207
          %v1214 = vadd.f32 %v1159, %v1207
          %v1215 = vadd.f32 %v1164, %v1207
          %v1216 = vadd.f32 %v1167, %v1207
          %v1217 = vadd.f32 %v1172, %v1207
          %v1218 = vadd.f32 %v1175, %v1207
          %v1219 = vadd.f32 %v1180, %v1207
          %v1220 = vadd.f32 %v1183, %v1207
          %v1221 = vadd.f32 %v1188, %v1207
          %v1222 = vadd.f32 %v1191, %v1207
          %v1223 = vadd.f32 %v1196, %v1207
          %v1224 = vadd.f32 %v1199, %v1207
          %v1225 = vmax.f32 %v1209, 0.0
          %v1226 = vmax.f32 %v1210, 0.0
          %v1227 = vmax.f32 %v1211, 0.0
          %v1228 = vmax.f32 %v1212, 0.0
          %v1229 = vmax.f32 %v1213, 0.0
          %v1230 = vmax.f32 %v1214, 0.0
          %v1231 = vmax.f32 %v1215, 0.0
          %v1232 = vmax.f32 %v1216, 0.0
          %v1233 = vmax.f32 %v1217, 0.0
          %v1234 = vmax.f32 %v1218, 0.0
          %v1235 = vmax.f32 %v1219, 0.0
          %v1236 = vmax.f32 %v1220, 0.0
          %v1237 = vmax.f32 %v1221, 0.0
          %v1238 = vmax.f32 %v1222, 0.0
          %v1239 = vmax.f32 %v1223, 0.0
          %v1240 = vmax.f32 %v1224, 0.0
          %v1241 = vpack.c.bf16 %v1226, %v1225
          %v1242 = vpack.c.bf16 %v1228, %v1227
          %v1243 = vpack.c.bf16 %v1230, %v1229
          %v1244 = vpack.c.bf16 %v1232, %v1231
          %v1245 = vpack.c.bf16 %v1234, %v1233
          %v1246 = vpack.c.bf16 %v1236, %v1235
          %v1247 = vpack.c.bf16 %v1238, %v1237
          %v1248 = vpack.c.bf16 %v1240, %v1239
          %v1257 = vunpack.c.l.b16 %v1241
          %v1258 = vunpack.c.h.b16 %v1241
          %v1259 = vunpack.c.l.b16 %v1242
          %v1260 = vunpack.c.h.b16 %v1242
          %v1261 = vunpack.c.l.b16 %v1243
          %v1262 = vunpack.c.h.b16 %v1243
          %v1263 = vunpack.c.l.b16 %v1244
          %v1264 = vunpack.c.h.b16 %v1244
          %v1265 = vunpack.c.l.b16 %v1245
          %v1266 = vunpack.c.h.b16 %v1245
          %v1267 = vunpack.c.l.b16 %v1246
          %v1268 = vunpack.c.h.b16 %v1246
          %v1269 = vunpack.c.l.b16 %v1247
          %v1270 = vunpack.c.h.b16 %v1247
          %v1271 = vunpack.c.l.b16 %v1248
          %v1272 = vunpack.c.h.b16 %v1248
          %v1273 = vpack.c.b16 %v1257, %v1257
          %v1274 = vpack.c.b16 %v1258, %v1258
          %v1275 = vpack.c.b16 %v1259, %v1259
          %v1276 = vpack.c.b16 %v1260, %v1260
          %v1277 = vpack.c.b16 %v1261, %v1261
          %v1278 = vpack.c.b16 %v1262, %v1262
          %v1279 = vpack.c.b16 %v1263, %v1263
          %v1280 = vpack.c.b16 %v1264, %v1264
          %v1281 = vpack.c.b16 %v1265, %v1265
          %v1282 = vpack.c.b16 %v1266, %v1266
          %v1283 = vpack.c.b16 %v1267, %v1267
          %v1284 = vpack.c.b16 %v1268, %v1268
          %v1285 = vpack.c.b16 %v1269, %v1269
          %v1286 = vpack.c.b16 %v1270, %v1270
          %v1287 = vpack.c.b16 %v1271, %v1271
          %v1288 = vpack.c.b16 %v1272, %v1272
          %1305 = vst [vmem:[%s423] sm:$0xf] %v1273
          %1306 = vst [vmem:[%s423 + $0x4] sm:$0xf] %v1274
          %1307 = vst [vmem:[%s423 + $0x8] sm:$0xf] %v1275
          %1308 = vst [vmem:[%s423 + $0xc] sm:$0xf] %v1276
          %1309 = vst [vmem:[%s423 + $0x10] sm:$0xf] %v1277
          %1310 = vst [vmem:[%s423 + $0x14] sm:$0xf] %v1278
          %1311 = vst [vmem:[%s423 + $0x18] sm:$0xf] %v1279
          %1312 = vst [vmem:[%s423 + $0x1c] sm:$0xf] %v1280
          %1313 = vst [vmem:[%s423 + $0x20] sm:$0xf] %v1281
          %1314 = vst [vmem:[%s423 + $0x24] sm:$0xf] %v1282
          %1315 = vst [vmem:[%s423 + $0x28] sm:$0xf] %v1283
          %1316 = vst [vmem:[%s423 + $0x2c] sm:$0xf] %v1284
          %1317 = vst [vmem:[%s423 + $0x30] sm:$0xf] %v1285
          %1318 = vst [vmem:[%s423 + $0x34] sm:$0xf] %v1286
          %1319 = vst [vmem:[%s423 + $0x38] sm:$0xf] %v1287
          %1320 = vst [vmem:[%s423 + $0x3c] sm:$0xf] %v1288
        $region102: #{tpu_custom_call.1} parent=77 // pred_fallthru
          _
        %s1321 = sand.u32 %s194, 1
        %s1322 = scalar_lea.sflag [#allocation6], %s1321
        %s1323 = sand.u32 %s194, 1
        %s1324 = smul.addr %s1323, 64
        %s1325 = scalar_lea.vmem [#allocation10], %s1324
        // Predicated region
        $region103: #{tpu_custom_call.1} parent=77 // pred_check
          %p1326 = pneg %p204
        $region104: #{tpu_custom_call.1} parent=77 // pred_check_branch
          %1328 = sbr.rel (%p1326) target = $region106
        $region105: #{tpu_custom_call.1} parent=77 // pred_region
          %s1329 = smul.u32 16, %s30
          %s1331 = ssub.s32 1024, 1024
          %1332 = vsyncadd %s1322, %s1331
          %s1333 = smul.addr %s1329, 64
          %s1334 = scalar_lea.hbm %s6, %s1333
          %s1335 = sshll.u32 %s1325, 4
          %s1336 = int_to_ptr.vmem [resolvable:$true] %s1335
          %1341 = dma.vmem_to_hbm [thread:$0]  %s1336, 1024, %s1334, %s1322, 64, 64, 4
        $region106: #{tpu_custom_call.1} parent=77 // pred_fallthru
          _
      $region78: #{tpu_custom_call.1} parent=5 // pred_fallthru
        _
      %p1342 = scmp.le.s32.totalorder 2, %s21
      // Predicated region
      $region107: #{tpu_custom_call.1} parent=5 // pred_check
        %p1343 = pneg %p1342
      $region108: #{tpu_custom_call.1} parent=5 // pred_check_branch
        %1345 = sbr.rel (%p1343) target = $region110
      $region109: #{tpu_custom_call.1} parent=5 // pred_region
        %s1346 = ssub.s32 %s21, 2
        // Predicated region
        $region111: #{tpu_custom_call.1} parent=109 // pred_check
          %p1347 = pneg %p210
        $region112: #{tpu_custom_call.1} parent=109 // pred_check_branch
          %1349 = sbr.rel (%p1347) target = $region114
        $region113: #{tpu_custom_call.1} parent=109 // pred_region
          %s1350 = sand.u32 %s195, 1
          %s1351 = scalar_lea.sflag [#allocation6], %s1350
          %s1352 = sand.u32 %s195, 1
          %s1353 = smul.addr %s1352, 64
          %s1354 = scalar_lea.vmem [#allocation10], %s1353
          %1355 = dma.done %s1351, 1024
        $region114: #{tpu_custom_call.1} parent=109 // pred_fallthru
          _
      $region110: #{tpu_custom_call.1} parent=5 // pred_fallthru
        _
    $region6: #{tpu_custom_call.1} parent=1 // loop_footer
      %s25 = sadd.s32 1, %s21
    $region7: #{tpu_custom_call.1} parent=1 // loop_footer_branch
      %20 = sbr.rel target = $region3
    $region8: #{tpu_custom_call.1} parent=1 // loop_exit
      _
    %1356 = vsyncpa [#allocation5], 1
    %s1357 = scalar_lea.sflag [#allocation5], 1
    %1358 = vsyncpa %s1357, 1
    %1359 = vsyncpa [#allocation8], 1
    %s1360 = scalar_lea.sflag [#allocation8], 1
    %1361 = vsyncpa %s1360, 1
    %1362 = vsyncpa [#allocation6], 1
    %s1363 = scalar_lea.sflag [#allocation6], 1
    %1364 = vsyncpa %s1363, 1

</llo_original>
